<compile_context>
chip_gen: v5e
topology: v5e:2x2
jax: 0.10.0
libtpu: 0.0.40
codegen_flags: <defaults>
</compile_context>

<pallas_src>
import jax
import jax.numpy as jnp
from jax.experimental import pallas as pl
from jax.experimental.pallas import tpu as pltpu


def _round_up(x, m):
    return ((x + m - 1) // m) * m


def _choose_tile(B, batch_tile, align):
    """Pick the batch tile.

    * cap so the parallel grid has >= 2 steps when B allows it (v7x has 2 TCs
      sharing the parallel grid axis; v5e/v6e are unaffected),
    * round to `align` (16 for bf16 operands, 8 for f32),
    * if one tile covers the whole batch, use a full-extent block (block dims
      == array dims -> always a legal BlockSpec, no padding, no ragged block).
    """
    cap = _round_up(max(pl.cdiv(B, 2), align), align)
    tile = min(_round_up(batch_tile, align), cap)
    if tile >= B:
        return B
    return tile


def _make_kernel(n_hidden_linears, h0_pad, matmul_dtype):
    """Fused kernel for a static number of hidden (ReLU'd) model linears.

    Ref layout:
      x [tile, in] (f32, cast in-kernel),
      w_in [in, 2*h0_pad], b_in [1, 2*h0_pad],
      (w_i, b_i) * n_hidden_linears  (K and N padded to 128-lane multiples),
      w_out [h_last_pad, out_pad], b_out [1, out_pad],
      out_ref [tile, out_pad]
    Weights are pre-transposed ([in, out]) and cast to matmul_dtype; biases are f32.
    """

    def kernel(x_ref, win_ref, bin_ref, *rest):
        out_ref = rest[-1]
        params = rest[:-1]

        # Cast x in VMEM (f32 read from HBM, bf16 only for the MXU operand).
        x = x_ref[...].astype(matmul_dtype)

        # Fused left/right projection: one MXU push with N = 2*h0_pad.
        z = jnp.dot(x, win_ref[...], preferred_element_type=jnp.float32) + bin_ref[...]
        left = jnp.maximum(z[:, :h0_pad], 0.0)   # ReLU  (Dropout identity, eval)
        right = jnp.tanh(z[:, h0_pad:])          # Tanh  (Dropout identity, eval)
        h = left + right                         # f32 activations throughout

        # Hidden model linears, each followed by ReLU (Dropout identity).
        for li in range(n_hidden_linears):
            w = params[2 * li][...]
            b = params[2 * li + 1][...]
            h = jnp.dot(h.astype(w.dtype), w, preferred_element_type=jnp.float32) + b
            h = jnp.maximum(h, 0.0)

        # Folded (last model Linear o final_output), zero-padded to 128 output
        # lanes so the store is lane-dense (no masked vst).
        w_out = params[-2][...]
        b_out = params[-1][...]
        out_ref[...] = (
            jnp.dot(h.astype(w_out.dtype), w_out, preferred_element_type=jnp.float32)
            + b_out
        ).astype(out_ref.dtype)

    return kernel


def prepare_params(params, matmul_dtype=jnp.bfloat16):
    """One-time parameter fusion / folding / padding / casting (hoisted out of forward)."""
    in_size = params["left_w"].shape[0]
    H0 = params["left_w"].shape[1]
    out_size = params["final_w"].shape[1]
    hidden_last = params["final_w"].shape[0]

    # The original module is only shape-consistent if output_size == hidden_sizes[-1].
    if params["model_w"][-1].shape[1] != hidden_last:
        raise ValueError(
            "TextGenerator requires output_size == hidden_sizes[-1] "
            f"(got model output {params['model_w'][-1].shape[1]} vs final_output "
            f"in_features {hidden_last})"
        )

    def pad_n(a, n_to):  # pad output (lane) dim with zero columns
        return jnp.pad(a, ((0, 0), (0, n_to - a.shape[1])))

    def pad_k(a, k_to):  # pad contraction dim with zero rows
        return jnp.pad(a, ((0, k_to - a.shape[0]), (0, 0)))

    # Fuse left/right projections; pad EACH half to a 128-lane multiple so the
    # in-kernel column split is tile-aligned (no intra-vreg relayout).
    H0p = _round_up(H0, 128)
    w_in = jnp.concatenate(
        [pad_n(params["left_w"], H0p), pad_n(params["right_w"], H0p)], axis=1
    )  # [in, 2*H0p]
    b_in = jnp.concatenate(
        [pad_n(params["left_b"], H0p), pad_n(params["right_b"], H0p)], axis=1
    )  # [1, 2*H0p]

    flat = [w_in.astype(matmul_dtype), b_in.astype(jnp.float32)]

    # Hidden model linears: pad K to the previous padded width (zero rows) and
    # N to a 128-lane multiple (zero cols + zero bias) -> numerically exact.
    prev_pad = H0p
    for w, b in zip(params["model_w"][:-1], params["model_b"][:-1]):
        n_pad = _round_up(w.shape[1], 128)
        flat += [
            pad_k(pad_n(w, n_pad), prev_pad).astype(matmul_dtype),
            pad_n(b, n_pad).astype(jnp.float32),
        ]
        prev_pad = n_pad

    # Fold last model Linear with final_output (no nonlinearity between them),
    # then pad to 128 output lanes for a lane-dense store.
    w_fold = params["model_w"][-1] @ params["final_w"]                      # [h_last, out]
    b_fold = params["model_b"][-1] @ params["final_w"] + params["final_b"]  # [1, out]
    out_pad = _round_up(out_size, 128)
    flat += [
        pad_k(pad_n(w_fold, out_pad), prev_pad).astype(matmul_dtype),
        pad_n(b_fold, out_pad).astype(jnp.float32),
    ]

    return {
        "flat": tuple(flat),
        "n_hidden": len(params["model_w"]) - 1,
        "h0_pad": H0p,
        "in_size": in_size,
        "out_size": out_size,
        "out_pad": out_pad,
        "matmul_dtype": matmul_dtype,
    }


def text_generator_forward(x, prepared, *, batch_tile=512):
    """Fused TextGenerator forward pass via a single Pallas TPU kernel."""
    B, in_size = x.shape
    assert in_size == prepared["in_size"], "input feature size mismatch"

    flat = prepared["flat"]
    out_pad = prepared["out_pad"]
    out_size = prepared["out_size"]
    matmul_dtype = prepared["matmul_dtype"]

    # Batch tiling: no padding, ragged last block (rows are independent; any
    # garbage in out-of-bounds rows is never written back to valid rows).
    align = 16 if matmul_dtype == jnp.bfloat16 else 8
    tile = _choose_tile(B, batch_tile, align)
    grid = (pl.cdiv(B, tile),)

    def full_spec(a):
        nd = a.ndim
        # TODO(synk): pipeline_mode=pl.Buffered(1) for these constant blocks on v7x.
        return pl.BlockSpec(a.shape, lambda i, nd=nd: (0,) * nd)

    in_specs = [pl.BlockSpec((tile, in_size), lambda i: (i, 0))] + [
        full_spec(a) for a in flat
    ]
    out_spec = pl.BlockSpec((tile, out_pad), lambda i: (i, 0))

    kernel = _make_kernel(prepared["n_hidden"], prepared["h0_pad"], matmul_dtype)

    # Advisory cost hint for XLA scheduling around the custom call.
    flops = 2 * B * sum(int(w.shape[0]) * int(w.shape[1]) for w in flat[0::2])
    bytes_accessed = (
        B * in_size * 4
        + sum(int(a.size) * a.dtype.itemsize for a in flat)
        + B * out_pad * 4
    )
    cost = pl.CostEstimate(
        flops=int(flops),
        transcendentals=int(B * prepared["h0_pad"]),
        bytes_accessed=int(bytes_accessed),
    )

    # Explicit VMEM budget: double-buffered x/out tiles + (default double-buffered)
    # resident weights + a few activation slabs, with headroom; clamp to 64 MiB.
    weight_bytes = sum(int(a.size) * a.dtype.itemsize for a in flat)
    max_width = max(int(a.shape[1]) for a in flat[0::2])
    est = (
        2 * weight_bytes
        + 2 * (tile * in_size * 4 + tile * out_pad * 4)
        + 4 * (4 * tile * max_width)
        + (4 << 20)
    )
    vmem_limit = int(min(max(est, 16 << 20), 64 << 20))

    out = pl.pallas_call(
        kernel,
        out_shape=jax.ShapeDtypeStruct((B, out_pad), jnp.float32),
        grid_spec=pltpu.PrefetchScalarGridSpec(
            num_scalar_prefetch=0,
            grid=grid,
            in_specs=in_specs,
            out_specs=out_spec,
        ),
        compiler_params=pltpu.CompilerParams(
            dimension_semantics=("parallel",),
            vmem_limit_bytes=vmem_limit,
        ),
        cost_estimate=cost,
    )(x.astype(jnp.float32), *flat)

    return out[:, :out_size]


def init_params(key, input_size, hidden_sizes, output_size):
    """Deterministic parameter init (PyTorch-style uniform bounds)."""

    def linear(k, fan_in, fan_out):
        kw, kb = jax.random.split(k)
        bound = 1.0 / jnp.sqrt(fan_in)
        w = jax.random.uniform(kw, (fan_in, fan_out), jnp.float32, -bound, bound)
        b = jax.random.uniform(kb, (1, fan_out), jnp.float32, -bound, bound)
        return w, b

    keys = jax.random.split(key, 4 + len(hidden_sizes))
    params = {}
    params["left_w"], params["left_b"] = linear(keys[0], input_size, hidden_sizes[0])
    params["right_w"], params["right_b"] = linear(keys[1], input_size, hidden_sizes[0])

    model_w, model_b = [], []
    prev = hidden_sizes[0]
    ki = 2
    for h in hidden_sizes[1:]:
        w, b = linear(keys[ki], prev, h)
        model_w.append(w)
        model_b.append(b)
        prev = h
        ki += 1
    w, b = linear(keys[ki], prev, output_size)  # last Linear of self.model
    model_w.append(w)
    model_b.append(b)
    ki += 1
    params["model_w"], params["model_b"] = model_w, model_b

    params["final_w"], params["final_b"] = linear(keys[ki], hidden_sizes[-1], output_size)
    return params


def reference_forward(x, params):
    """Plain-JAX f32 reference (direct port of the PyTorch eval-mode forward)."""
    left = jnp.maximum(x @ params["left_w"] + params["left_b"], 0.0)
    right = jnp.tanh(x @ params["right_w"] + params["right_b"])
    h = left + right
    n = len(params["model_w"])
    for li, (w, b) in enumerate(zip(params["model_w"], params["model_b"])):
        h = h @ w + b
        if li < n - 1:
            h = jnp.maximum(h, 0.0)
    return h @ params["final_w"] + params["final_b"]


if __name__ == "__main__":
    # output_size must equal hidden_sizes[-1] for the original forward to be valid.
    input_size = 32
    hidden_sizes = [32, 16]
    output_size = 16

    key = jax.random.PRNGKey(0)
    kx, kx2, kp = jax.random.split(key, 3)
    params = init_params(kp, input_size, hidden_sizes, output_size)

    prepared_f32 = prepare_params(params, matmul_dtype=jnp.float32)
    prepared_bf16 = prepare_params(params, matmul_dtype=jnp.bfloat16)

    # --- case 1: small ragged batch, single full-extent block (grid = 1) ---
    batch = 12  # deliberately not a multiple of 8
    x = jax.random.normal(kx, (batch, input_size), jnp.float32)
    y_ref = reference_forward(x, params)

    y_f32 = jax.block_until_ready(text_generator_forward(x, prepared_f32))
    assert y_f32.shape == (batch, output_size)
    assert jnp.allclose(y_f32, y_ref, atol=1e-4, rtol=1e-4), "f32 path mismatch (B=12)"

    y_bf16 = jax.block_until_ready(text_generator_forward(x, prepared_bf16))
    assert y_bf16.shape == (batch, output_size)
    assert jnp.allclose(y_bf16, y_ref, atol=1e-1, rtol=1e-1), "bf16 path mismatch (B=12)"

    # --- case 2: larger batch exercising a 2-step grid with a ragged last block ---
    batch2 = 100
    x2 = jax.random.normal(kx2, (batch2, input_size), jnp.float32)
    y2_ref = reference_forward(x2, params)

    y2_f32 = jax.block_until_ready(text_generator_forward(x2, prepared_f32))
    assert y2_f32.shape == (batch2, output_size)
    assert jnp.allclose(y2_f32, y2_ref, atol=1e-4, rtol=1e-4), "f32 path mismatch (B=100)"

    y2_bf16 = jax.block_until_ready(text_generator_forward(x2, prepared_bf16))
    assert y2_bf16.shape == (batch2, output_size)
    assert jnp.allclose(y2_bf16, y2_ref, atol=1.5e-1, rtol=1.5e-1), "bf16 path mismatch (B=100)"

    print("KERNEL_OK")
</pallas_src>

<mosaic_0001>
module attributes {stable_mosaic.version = 11 : i64} {
  func.func @kernel(%arg0: i32, %arg1: memref<8x32xf32, #tpu.memory_space<vmem>>, %arg2: memref<32x256xf32, #tpu.memory_space<vmem>>, %arg3: memref<1x256xf32, #tpu.memory_space<vmem>>, %arg4: memref<128x128xf32, #tpu.memory_space<vmem>>, %arg5: memref<1x128xf32, #tpu.memory_space<vmem>>, %arg6: memref<128x128xf32, #tpu.memory_space<vmem>>, %arg7: memref<1x128xf32, #tpu.memory_space<vmem>>, %arg8: memref<8x128xf32, #tpu.memory_space<vmem>>) attributes {dimension_semantics = [#tpu.dimension_semantics<parallel>], iteration_bounds = array<i64: 2>, scalar_prefetch = 0 : i64, scratch_operands = 0 : i64, tpu.core_type = #tpu.core_type<tc>, window_params = [{transform_indices = @transform_0, window_bounds = array<i64: 8, 32>}, {pipeline_mode = #tpu.pipeline_mode<synchronous>, transform_indices = @transform_1, window_bounds = array<i64: 32, 256>}, {pipeline_mode = #tpu.pipeline_mode<synchronous>, transform_indices = @transform_2, window_bounds = array<i64: 1, 256>}, {pipeline_mode = #tpu.pipeline_mode<synchronous>, transform_indices = @transform_3, window_bounds = array<i64: 128, 128>}, {pipeline_mode = #tpu.pipeline_mode<synchronous>, transform_indices = @transform_4, window_bounds = array<i64: 1, 128>}, {pipeline_mode = #tpu.pipeline_mode<synchronous>, transform_indices = @transform_5, window_bounds = array<i64: 128, 128>}, {pipeline_mode = #tpu.pipeline_mode<synchronous>, transform_indices = @transform_6, window_bounds = array<i64: 1, 128>}, {transform_indices = @transform_7, window_bounds = array<i64: 8, 128>}]} {
    %c0 = arith.constant 0 : index
    %c0_0 = arith.constant 0 : index
    %0 = vector.load %arg1[%c0, %c0_0] : memref<8x32xf32, #tpu.memory_space<vmem>>, vector<8x32xf32>
    %c0_1 = arith.constant 0 : index
    %c0_2 = arith.constant 0 : index
    %1 = vector.load %arg2[%c0_1, %c0_2] : memref<32x256xf32, #tpu.memory_space<vmem>>, vector<32x256xf32>
    %cst = arith.constant dense<0.000000e+00> : vector<8x256xf32>
    %2 = tpu.matmul %0, %1, %cst {dimension_numbers = #tpu.dot_dimension_numbers<[1], [0], [0], [1], [0, 0, 1, 1], [], []>} : vector<8x32xf32>, vector<32x256xf32>, vector<8x256xf32> -> vector<8x256xf32>
    %c0_3 = arith.constant 0 : index
    %c0_4 = arith.constant 0 : index
    %3 = vector.load %arg3[%c0_3, %c0_4] : memref<1x256xf32, #tpu.memory_space<vmem>>, vector<1x256xf32>
    %4 = vector.broadcast %3 : vector<1x256xf32> to vector<8x256xf32>
    %5 = arith.addf %2, %4 : vector<8x256xf32>
    %6 = vector.extract_strided_slice %5 {offsets = [0, 0], sizes = [8, 128], strides = [1, 1]} : vector<8x256xf32> to vector<8x128xf32>
    %cst_5 = arith.constant 0.000000e+00 : f32
    %7 = vector.broadcast %cst_5 : f32 to vector<8x128xf32>
    %8 = arith.maximumf %6, %7 : vector<8x128xf32>
    %9 = vector.extract_strided_slice %5 {offsets = [0, 128], sizes = [8, 128], strides = [1, 1]} : vector<8x256xf32> to vector<8x128xf32>
    %10 = math.tanh %9 : vector<8x128xf32>
    %11 = arith.addf %8, %10 : vector<8x128xf32>
    %c0_6 = arith.constant 0 : index
    %c0_7 = arith.constant 0 : index
    %12 = vector.load %arg4[%c0_6, %c0_7] : memref<128x128xf32, #tpu.memory_space<vmem>>, vector<128x128xf32>
    %c0_8 = arith.constant 0 : index
    %c0_9 = arith.constant 0 : index
    %13 = vector.load %arg5[%c0_8, %c0_9] : memref<1x128xf32, #tpu.memory_space<vmem>>, vector<1x128xf32>
    %cst_10 = arith.constant dense<0.000000e+00> : vector<8x128xf32>
    %14 = tpu.matmul %11, %12, %cst_10 {dimension_numbers = #tpu.dot_dimension_numbers<[1], [0], [0], [1], [0, 0, 1, 1], [], []>} : vector<8x128xf32>, vector<128x128xf32>, vector<8x128xf32> -> vector<8x128xf32>
    %15 = vector.broadcast %13 : vector<1x128xf32> to vector<8x128xf32>
    %16 = arith.addf %14, %15 : vector<8x128xf32>
    %cst_11 = arith.constant 0.000000e+00 : f32
    %17 = vector.broadcast %cst_11 : f32 to vector<8x128xf32>
    %18 = arith.maximumf %16, %17 : vector<8x128xf32>
    %c0_12 = arith.constant 0 : index
    %c0_13 = arith.constant 0 : index
    %19 = vector.load %arg6[%c0_12, %c0_13] : memref<128x128xf32, #tpu.memory_space<vmem>>, vector<128x128xf32>
    %c0_14 = arith.constant 0 : index
    %c0_15 = arith.constant 0 : index
    %20 = vector.load %arg7[%c0_14, %c0_15] : memref<1x128xf32, #tpu.memory_space<vmem>>, vector<1x128xf32>
    %cst_16 = arith.constant dense<0.000000e+00> : vector<8x128xf32>
    %21 = tpu.matmul %18, %19, %cst_16 {dimension_numbers = #tpu.dot_dimension_numbers<[1], [0], [0], [1], [0, 0, 1, 1], [], []>} : vector<8x128xf32>, vector<128x128xf32>, vector<8x128xf32> -> vector<8x128xf32>
    %22 = vector.broadcast %20 : vector<1x128xf32> to vector<8x128xf32>
    %23 = arith.addf %21, %22 : vector<8x128xf32>
    %c0_17 = arith.constant 0 : index
    %c0_18 = arith.constant 0 : index
    %24 = vector.load %arg8[%c0_17, %c0_18] : memref<8x128xf32, #tpu.memory_space<vmem>>, vector<8x128xf32>
    tpu.vector_store %arg8[%c0_17, %c0_18], %23 {strides = array<i32>} : memref<8x128xf32, #tpu.memory_space<vmem>>, vector<8x128xf32>,
    return
  }
  func.func @transform_0(%arg0: i32) -> (i32, i32) {
    %c0_i32 = arith.constant 0 : i32
    %c0_i32_0 = arith.constant 0 : i32
    return %arg0, %c0_i32 : i32, i32
  }
  func.func @transform_1(%arg0: i32) -> (i32, i32) {
    %c0_i32 = arith.constant 0 : i32
    %c0_i32_0 = arith.constant 0 : i32
    %c0_i32_1 = arith.constant 0 : i32
    return %c0_i32, %c0_i32_0 : i32, i32
  }
  func.func @transform_2(%arg0: i32) -> (i32, i32) {
    %c0_i32 = arith.constant 0 : i32
    %c0_i32_0 = arith.constant 0 : i32
    %c0_i32_1 = arith.constant 0 : i32
    return %c0_i32, %c0_i32_0 : i32, i32
  }
  func.func @transform_3(%arg0: i32) -> (i32, i32) {
    %c0_i32 = arith.constant 0 : i32
    %c0_i32_0 = arith.constant 0 : i32
    %c0_i32_1 = arith.constant 0 : i32
    return %c0_i32, %c0_i32_0 : i32, i32
  }
  func.func @transform_4(%arg0: i32) -> (i32, i32) {
    %c0_i32 = arith.constant 0 : i32
    %c0_i32_0 = arith.constant 0 : i32
    %c0_i32_1 = arith.constant 0 : i32
    return %c0_i32, %c0_i32_0 : i32, i32
  }
  func.func @transform_5(%arg0: i32) -> (i32, i32) {
    %c0_i32 = arith.constant 0 : i32
    %c0_i32_0 = arith.constant 0 : i32
    %c0_i32_1 = arith.constant 0 : i32
    return %c0_i32, %c0_i32_0 : i32, i32
  }
  func.func @transform_6(%arg0: i32) -> (i32, i32) {
    %c0_i32 = arith.constant 0 : i32
    %c0_i32_0 = arith.constant 0 : i32
    %c0_i32_1 = arith.constant 0 : i32
    return %c0_i32, %c0_i32_0 : i32, i32
  }
  func.func @transform_7(%arg0: i32) -> (i32, i32) {
    %c0_i32 = arith.constant 0 : i32
    %c0_i32_0 = arith.constant 0 : i32
    return %arg0, %c0_i32 : i32, i32
  }
}

</mosaic_0001>

<llo_original>
// kernel: tpu_custom_call.1
$region0: #{tpu_custom_call.1}
  #allocation0 [shape = 'u32[]', space=smem, size = 0x4, offset = 0x4, fixed_abs, tag = 'smem constant byte address 0x4 - core index']
  #allocation1 [shape = 'u32[72,128]{1,0:T(1,128)}', space=vmem, size = 0x9000, scoped, tag = 'internal scratch']
  %s0 = inlined_call_operand.hbm [shape: f32[12,32], index: 0, kind: input, shape index: {}]
  %s1 = inlined_call_operand.hbm [shape: f32[32,256], index: 1, kind: input, shape index: {}]
  %s2 = inlined_call_operand.hbm [shape: f32[1,256], index: 2, kind: input, shape index: {}]
  %s3 = inlined_call_operand.hbm [shape: f32[128,128], index: 3, kind: input, shape index: {}]
  %s4 = inlined_call_operand.vmem [shape: f32[1,128], index: 4, kind: input, shape index: {}]
  %s5 = inlined_call_operand.hbm [shape: f32[128,128], index: 5, kind: input, shape index: {}]
  %s6 = inlined_call_operand.vmem [shape: f32[1,128], index: 6, kind: input, shape index: {}]
  %s7 = inlined_call_operand.hbm [shape: f32[12,128], index: 7, kind: output, shape index: {}]
  %s8 = sld [smem:[#allocation0]]
  $region81: #{tpu_custom_call.1} parent=0
    _
  %s10 = ssub.s32 1, %s8
  %s11 = scalar_select 0, %s10, %s8
  $region1: #{tpu_custom_call.1} parent=0
    #allocation2 [shape = 'u8[8192]{0}', space=vmem, size = 0x2000, scoped, tag = 'input window, operand 0']
    #allocation3 [shape = 's32[2]{0}', space=sflag, size = 0x8, scoped, tag = 'scoped memory for tpu_custom_call.1']
    #allocation4 [shape = 's32[2]{0}', space=sflag, size = 0x8, scoped, tag = 'scoped memory for tpu_custom_call.1']
    #allocation5 [shape = 'u8[32768]{0}', space=vmem, size = 0x8000, scoped, tag = 'input window, operand 1, single buffered']
    #allocation6 [shape = 's32[1]{0}', space=sflag, size = 0x4, scoped, tag = 'scoped memory for tpu_custom_call.1']
    #allocation7 [shape = 'u8[1024]{0}', space=vmem, size = 0x400, scoped, tag = 'input window, operand 2, single buffered']
    #allocation8 [shape = 'u8[65536]{0}', space=vmem, size = 0x10000, scoped, tag = 'input window, operand 3, single buffered']
    #allocation9 [shape = 's32[1]{0}', space=sflag, size = 0x4, scoped, tag = 'scoped memory for tpu_custom_call.1']
    #allocation10 [shape = 'u8[65536]{0}', space=vmem, size = 0x10000, scoped, tag = 'input window, operand 5, single buffered']
    #allocation11 [shape = 'u8[8192]{0}', space=vmem, size = 0x2000, scoped, tag = 'output window, operand 0']
    %12 = vsyncpa [#allocation3], 0
    %s13 = scalar_lea.sflag [#allocation3], 1
    %14 = vsyncpa %s13, 0
    %15 = vsyncpa [#allocation6], 0
    %16 = vsyncpa [#allocation9], 0
    %17 = vsyncpa [#allocation4], 0
    %s18 = scalar_lea.sflag [#allocation4], 1
    %19 = vsyncpa %s18, 0
    loop: start=0, step=1, limit=4
    $region2: #{tpu_custom_call.1} parent=1 // loop_pre_header
      _
    $region3: #{tpu_custom_call.1} parent=1 // loop_header
      %s21 = sphi 0, %s25
      %p22 = scmp.ge.s32.totalorder %s21, 4
      %s31 = sphi 0, %s33
      %s34 = sphi 0, %s31
      %s35 = sphi 0, %s34
      %s51 = sphi 0, %s35
      %s55 = sphi 0, %s55
      %s57 = sphi 0, %s55
      %s58 = sphi 0, %s57
      %s72 = sphi 0, %s58
      %s76 = sphi 0, %s76
      %s78 = sphi 0, %s76
      %s79 = sphi 0, %s78
      %s93 = sphi 0, %s79
      %s97 = sphi 0, %s97
      %s99 = sphi 0, %s97
      %s100 = sphi 0, %s99
      %s114 = sphi 0, %s100
      %s118 = sphi 0, %s118
      %s120 = sphi 0, %s118
      %s121 = sphi 0, %s120
      %s135 = sphi 0, %s121
      %s139 = sphi 0, %s139
      %s141 = sphi 0, %s139
      %s142 = sphi 0, %s141
      %s156 = sphi 0, %s142
      %s160 = sphi 0, %s160
      %s162 = sphi 0, %s160
      %s163 = sphi 0, %s162
      %s177 = sphi 0, %s163
      %s183 = sphi 0, %s185
      %s186 = sphi 0, %s183
      %s187 = sphi 0, %s186
      %s203 = sphi 0, %s187
    $region4: #{tpu_custom_call.1} parent=1 // loop_header_branch
      %24 = sbr.rel (%p22) target = $region8
    $region5: #{tpu_custom_call.1} parent=1 // loop_body
      %s26 = ssub.s32 %s21, 1
      %s27 = ssub.s32 %s21, 2
      %s28 = sadd.s32 %s21, 1
      %s29 = ssub.s32 %s21, %s28
      %p30 = scmp.eq.s32.totalorder %s29, 0
      %s32 = sadd.s32 %s31, 1
      %s33 = scalar_select %p30, %s31, %s32
      %p36 = pneg %p30
      %p37 = scmp.eq.s32.totalorder %s21, 1
      %p38 = por %p36, %p37
      %p39 = scmp.ne.s32.totalorder %s31, %s34
      %p40 = scmp.eq.s32.totalorder %s21, 0
      %p41 = por %p39, %p40
      %p42 = scmp.ne.s32.totalorder %s31, %s34
      %p43 = scmp.eq.s32.totalorder %s26, 1
      %p44 = por %p42, %p43
      %p45 = scmp.ne.s32.totalorder %s34, %s35
      %p46 = scmp.eq.s32.totalorder %s26, 0
      %p47 = por %p45, %p46
      %p48 = scmp.ne.s32.totalorder %s34, %s35
      %p49 = scmp.eq.s32.totalorder %s27, 1
      %p50 = por %p48, %p49
      %p52 = scmp.ne.s32.totalorder %s35, %s51
      %p53 = scmp.eq.s32.totalorder %s27, 0
      %p54 = por %p52, %p53
      %s56 = sadd.s32 %s55, 1
      %p59 = scmp.eq.s32.totalorder %s21, 1
      %p60 = scmp.ne.s32.totalorder %s55, %s57
      %p61 = scmp.eq.s32.totalorder %s21, 0
      %p62 = por %p60, %p61
      %p63 = scmp.ne.s32.totalorder %s55, %s57
      %p64 = scmp.eq.s32.totalorder %s26, 1
      %p65 = por %p63, %p64
      %p66 = scmp.ne.s32.totalorder %s57, %s58
      %p67 = scmp.eq.s32.totalorder %s26, 0
      %p68 = por %p66, %p67
      %p69 = scmp.ne.s32.totalorder %s57, %s58
      %p70 = scmp.eq.s32.totalorder %s27, 1
      %p71 = por %p69, %p70
      %p73 = scmp.ne.s32.totalorder %s58, %s72
      %p74 = scmp.eq.s32.totalorder %s27, 0
      %p75 = por %p73, %p74
      %s77 = sadd.s32 %s76, 1
      %p80 = scmp.eq.s32.totalorder %s21, 1
      %p81 = scmp.ne.s32.totalorder %s76, %s78
      %p82 = scmp.eq.s32.totalorder %s21, 0
      %p83 = por %p81, %p82
      %p84 = scmp.ne.s32.totalorder %s76, %s78
      %p85 = scmp.eq.s32.totalorder %s26, 1
      %p86 = por %p84, %p85
      %p87 = scmp.ne.s32.totalorder %s78, %s79
      %p88 = scmp.eq.s32.totalorder %s26, 0
      %p89 = por %p87, %p88
      %p90 = scmp.ne.s32.totalorder %s78, %s79
      %p91 = scmp.eq.s32.totalorder %s27, 1
      %p92 = por %p90, %p91
      %p94 = scmp.ne.s32.totalorder %s79, %s93
      %p95 = scmp.eq.s32.totalorder %s27, 0
      %p96 = por %p94, %p95
      %s98 = sadd.s32 %s97, 1
      %p101 = scmp.eq.s32.totalorder %s21, 1
      %p102 = scmp.ne.s32.totalorder %s97, %s99
      %p103 = scmp.eq.s32.totalorder %s21, 0
      %p104 = por %p102, %p103
      %p105 = scmp.ne.s32.totalorder %s97, %s99
      %p106 = scmp.eq.s32.totalorder %s26, 1
      %p107 = por %p105, %p106
      %p108 = scmp.ne.s32.totalorder %s99, %s100
      %p109 = scmp.eq.s32.totalorder %s26, 0
      %p110 = por %p108, %p109
      %p111 = scmp.ne.s32.totalorder %s99, %s100
      %p112 = scmp.eq.s32.totalorder %s27, 1
      %p113 = por %p111, %p112
      %p115 = scmp.ne.s32.totalorder %s100, %s114
      %p116 = scmp.eq.s32.totalorder %s27, 0
      %p117 = por %p115, %p116
      %s119 = sadd.s32 %s118, 1
      %p122 = scmp.eq.s32.totalorder %s21, 1
      %p123 = scmp.ne.s32.totalorder %s118, %s120
      %p124 = scmp.eq.s32.totalorder %s21, 0
      %p125 = por %p123, %p124
      %p126 = scmp.ne.s32.totalorder %s118, %s120
      %p127 = scmp.eq.s32.totalorder %s26, 1
      %p128 = por %p126, %p127
      %p129 = scmp.ne.s32.totalorder %s120, %s121
      %p130 = scmp.eq.s32.totalorder %s26, 0
      %p131 = por %p129, %p130
      %p132 = scmp.ne.s32.totalorder %s120, %s121
      %p133 = scmp.eq.s32.totalorder %s27, 1
      %p134 = por %p132, %p133
      %p136 = scmp.ne.s32.totalorder %s121, %s135
      %p137 = scmp.eq.s32.totalorder %s27, 0
      %p138 = por %p136, %p137
      %s140 = sadd.s32 %s139, 1
      %p143 = scmp.eq.s32.totalorder %s21, 1
      %p144 = scmp.ne.s32.totalorder %s139, %s141
      %p145 = scmp.eq.s32.totalorder %s21, 0
      %p146 = por %p144, %p145
      %p147 = scmp.ne.s32.totalorder %s139, %s141
      %p148 = scmp.eq.s32.totalorder %s26, 1
      %p149 = por %p147, %p148
      %p150 = scmp.ne.s32.totalorder %s141, %s142
      %p151 = scmp.eq.s32.totalorder %s26, 0
      %p152 = por %p150, %p151
      %p153 = scmp.ne.s32.totalorder %s141, %s142
      %p154 = scmp.eq.s32.totalorder %s27, 1
      %p155 = por %p153, %p154
      %p157 = scmp.ne.s32.totalorder %s142, %s156
      %p158 = scmp.eq.s32.totalorder %s27, 0
      %p159 = por %p157, %p158
      %s161 = sadd.s32 %s160, 1
      %p164 = scmp.eq.s32.totalorder %s21, 1
      %p165 = scmp.ne.s32.totalorder %s160, %s162
      %p166 = scmp.eq.s32.totalorder %s21, 0
      %p167 = por %p165, %p166
      %p168 = scmp.ne.s32.totalorder %s160, %s162
      %p169 = scmp.eq.s32.totalorder %s26, 1
      %p170 = por %p168, %p169
      %p171 = scmp.ne.s32.totalorder %s162, %s163
      %p172 = scmp.eq.s32.totalorder %s26, 0
      %p173 = por %p171, %p172
      %p174 = scmp.ne.s32.totalorder %s162, %s163
      %p175 = scmp.eq.s32.totalorder %s27, 1
      %p176 = por %p174, %p175
      %p178 = scmp.ne.s32.totalorder %s163, %s177
      %p179 = scmp.eq.s32.totalorder %s27, 0
      %p180 = por %p178, %p179
      %s181 = ssub.s32 %s21, %s28
      %p182 = scmp.eq.s32.totalorder %s181, 0
      %s184 = sadd.s32 %s183, 1
      %s185 = scalar_select %p182, %s183, %s184
      %p188 = pneg %p182
      %p189 = scmp.eq.s32.totalorder %s21, 1
      %p190 = por %p188, %p189
      %p191 = scmp.ne.s32.totalorder %s183, %s186
      %p192 = scmp.eq.s32.totalorder %s21, 0
      %p193 = por %p191, %p192
      %p194 = scmp.ne.s32.totalorder %s183, %s186
      %p195 = scmp.eq.s32.totalorder %s26, 1
      %p196 = por %p194, %p195
      %p197 = scmp.ne.s32.totalorder %s186, %s187
      %p198 = scmp.eq.s32.totalorder %s26, 0
      %p199 = por %p197, %p198
      %p200 = scmp.ne.s32.totalorder %s186, %s187
      %p201 = scmp.eq.s32.totalorder %s27, 1
      %p202 = por %p200, %p201
      %p204 = scmp.ne.s32.totalorder %s187, %s203
      %p205 = scmp.eq.s32.totalorder %s27, 0
      %p206 = por %p204, %p205
      %p207 = scmp.le.s32.totalorder 1, %s21
      %p208 = scmp.lt.s32.totalorder %s21, 3
      %p209 = pnand %p207, %p208
      %p210 = pneg %p209
      // Predicated region
      $region9: #{tpu_custom_call.1} parent=5 // pred_check
        _
      $region10: #{tpu_custom_call.1} parent=5 // pred_check_branch
        %212 = sbr.rel (%p209) target = $region12
      $region11: #{tpu_custom_call.1} parent=5 // pred_region
        %s213 = ssub.s32 %s21, 1
        // Predicated region
        $region13: #{tpu_custom_call.1} parent=11 // pred_check
          %p214 = pneg %p68
        $region14: #{tpu_custom_call.1} parent=11 // pred_check_branch
          %216 = sbr.rel (%p214) target = $region16
        $region15: #{tpu_custom_call.1} parent=11 // pred_region
          %218 = vsyncadd [#allocation6], 0
          %s219 = sshll.u32 %s1, 4
          %s220 = int_to_ptr.hbm [resolvable:$true] %s219
          %s221 = sshll.u32 [#allocation5], 4
          %s222 = int_to_ptr.vmem [resolvable:$true] %s221
          %227 = dma.hbm_to_vmem [thread:$0]  %s220, 1024, %s222, [#allocation6], 256, 256, 16
        $region16: #{tpu_custom_call.1} parent=11 // pred_fallthru
          _
        // Predicated region
        $region17: #{tpu_custom_call.1} parent=11 // pred_check
          %p228 = pneg %p89
        $region18: #{tpu_custom_call.1} parent=11 // pred_check_branch
          %230 = sbr.rel (%p228) target = $region20
        $region19: #{tpu_custom_call.1} parent=11 // pred_region
          %232 = vsyncadd [#allocation6], 0
          %s234 = sshll.u32 %s2, 4
          %s235 = int_to_ptr.hbm [resolvable:$true] %s234
          %s236 = sshll.u32 [#allocation7], 4
          %s237 = int_to_ptr.vmem [resolvable:$true] %s236
          %239 = dma.hbm_to_vmem [thread:$0]  %s235, 32, %s237, [#allocation6]
        $region20: #{tpu_custom_call.1} parent=11 // pred_fallthru
          _
        // Predicated region
        $region21: #{tpu_custom_call.1} parent=11 // pred_check
          %p240 = pneg %p110
        $region22: #{tpu_custom_call.1} parent=11 // pred_check_branch
          %242 = sbr.rel (%p240) target = $region24
        $region23: #{tpu_custom_call.1} parent=11 // pred_region
          %244 = vsyncadd [#allocation9], 0
          %s245 = sshll.u32 %s3, 4
          %s246 = int_to_ptr.hbm [resolvable:$true] %s245
          %s247 = sshll.u32 [#allocation8], 4
          %s248 = int_to_ptr.vmem [resolvable:$true] %s247
          %253 = dma.hbm_to_vmem [thread:$0]  %s246, 2048, %s248, [#allocation9], 128, 128, 8
        $region24: #{tpu_custom_call.1} parent=11 // pred_fallthru
          _
        // Predicated region
        $region25: #{tpu_custom_call.1} parent=11 // pred_check
          %p254 = pneg %p131
        $region26: #{tpu_custom_call.1} parent=11 // pred_check_branch
          %256 = sbr.rel (%p254) target = $region28
        $region27: #{tpu_custom_call.1} parent=11 // pred_region
          _
        $region28: #{tpu_custom_call.1} parent=11 // pred_fallthru
          _
        // Predicated region
        $region29: #{tpu_custom_call.1} parent=11 // pred_check
          %p257 = pneg %p152
        $region30: #{tpu_custom_call.1} parent=11 // pred_check_branch
          %259 = sbr.rel (%p257) target = $region32
        $region31: #{tpu_custom_call.1} parent=11 // pred_region
          %261 = vsyncadd [#allocation9], 0
          %s262 = sshll.u32 %s5, 4
          %s263 = int_to_ptr.hbm [resolvable:$true] %s262
          %s264 = sshll.u32 [#allocation10], 4
          %s265 = int_to_ptr.vmem [resolvable:$true] %s264
          %270 = dma.hbm_to_vmem [thread:$0]  %s263, 2048, %s265, [#allocation9], 128, 128, 8
        $region32: #{tpu_custom_call.1} parent=11 // pred_fallthru
          _
        // Predicated region
        $region33: #{tpu_custom_call.1} parent=11 // pred_check
          %p271 = pneg %p173
        $region34: #{tpu_custom_call.1} parent=11 // pred_check_branch
          %273 = sbr.rel (%p271) target = $region36
        $region35: #{tpu_custom_call.1} parent=11 // pred_region
          _
        $region36: #{tpu_custom_call.1} parent=11 // pred_fallthru
          _
      $region12: #{tpu_custom_call.1} parent=5 // pred_fallthru
        _
      %p274 = scmp.lt.s32.totalorder %s21, 2
      // Predicated region
      $region37: #{tpu_custom_call.1} parent=5 // pred_check
        %p275 = pneg %p274
      $region38: #{tpu_custom_call.1} parent=5 // pred_check_branch
        %277 = sbr.rel (%p275) target = $region40
      $region39: #{tpu_custom_call.1} parent=5 // pred_region
        // Predicated region
        $region41: #{tpu_custom_call.1} parent=39 // pred_check
          %p278 = pneg %p41
        $region42: #{tpu_custom_call.1} parent=39 // pred_check_branch
          %280 = sbr.rel (%p278) target = $region44
        $region43: #{tpu_custom_call.1} parent=39 // pred_region
          %s281 = sand.u32 %s31, 1
          %s282 = scalar_lea.sflag [#allocation3], %s281
          %s283 = sand.u32 %s31, 1
          %s284 = smul.addr %s283, 8
          %s285 = scalar_lea.vmem [#allocation2], %s284
          %287 = vsyncadd %s282, 0
          %s288 = smul.addr %s21, 8
          %s289 = scalar_lea.hbm %s0, %s288
          %s291 = sshll.u32 %s289, 4
          %s292 = int_to_ptr.hbm [resolvable:$true] %s291
          %s293 = sshll.u32 %s285, 4
          %s294 = int_to_ptr.vmem [resolvable:$true] %s293
          %296 = dma.hbm_to_vmem [thread:$0]  %s292, 128, %s294, %s282
        $region44: #{tpu_custom_call.1} parent=39 // pred_fallthru
          _
      $region40: #{tpu_custom_call.1} parent=5 // pred_fallthru
        _
      %p297 = scmp.le.s32.totalorder 1, %s21
      %p298 = scmp.lt.s32.totalorder %s21, 3
      %p299 = pnand %p297, %p298
      %p300 = pneg %p299
      // Predicated region
      $region45: #{tpu_custom_call.1} parent=5 // pred_check
        _
      $region46: #{tpu_custom_call.1} parent=5 // pred_check_branch
        %302 = sbr.rel (%p299) target = $region48
      $region47: #{tpu_custom_call.1} parent=5 // pred_region
        %s303 = ssub.s32 %s21, 1
        %s304 = sand.u32 %s34, 1
        %s305 = scalar_lea.sflag [#allocation3], %s304
        %s306 = sand.u32 %s34, 1
        %s307 = smul.addr %s306, 8
        %s308 = scalar_lea.vmem [#allocation2], %s307
        // Predicated region
        $region49: #{tpu_custom_call.1} parent=47 // pred_check
          %p309 = pneg %p47
        $region50: #{tpu_custom_call.1} parent=47 // pred_check_branch
          %311 = sbr.rel (%p309) target = $region52
        $region51: #{tpu_custom_call.1} parent=47 // pred_region
          %313 = dma.done %s305, 128
        $region52: #{tpu_custom_call.1} parent=47 // pred_fallthru
          _
        // Predicated region
        $region53: #{tpu_custom_call.1} parent=47 // pred_check
          %p314 = pneg %p68
        $region54: #{tpu_custom_call.1} parent=47 // pred_check_branch
          %316 = sbr.rel (%p314) target = $region56
        $region55: #{tpu_custom_call.1} parent=47 // pred_region
          %318 = dma.done [#allocation6], 1024
        $region56: #{tpu_custom_call.1} parent=47 // pred_fallthru
          _
        // Predicated region
        $region57: #{tpu_custom_call.1} parent=47 // pred_check
          %p319 = pneg %p89
        $region58: #{tpu_custom_call.1} parent=47 // pred_check_branch
          %321 = sbr.rel (%p319) target = $region60
        $region59: #{tpu_custom_call.1} parent=47 // pred_region
          %323 = dma.done [#allocation6], 32
        $region60: #{tpu_custom_call.1} parent=47 // pred_fallthru
          _
        // Predicated region
        $region61: #{tpu_custom_call.1} parent=47 // pred_check
          %p324 = pneg %p110
        $region62: #{tpu_custom_call.1} parent=47 // pred_check_branch
          %326 = sbr.rel (%p324) target = $region64
        $region63: #{tpu_custom_call.1} parent=47 // pred_region
          %328 = dma.done [#allocation9], 2048
        $region64: #{tpu_custom_call.1} parent=47 // pred_fallthru
          _
        // Predicated region
        $region65: #{tpu_custom_call.1} parent=47 // pred_check
          %p329 = pneg %p152
        $region66: #{tpu_custom_call.1} parent=47 // pred_check_branch
          %331 = sbr.rel (%p329) target = $region68
        $region67: #{tpu_custom_call.1} parent=47 // pred_region
          %333 = dma.done [#allocation9], 2048
        $region68: #{tpu_custom_call.1} parent=47 // pred_fallthru
          _
        %s334 = sand.u32 %s34, 1
        %s335 = scalar_lea.sflag [#allocation3], %s334
        %s336 = sand.u32 %s34, 1
        %s337 = smul.addr %s336, 8
        %s338 = scalar_lea.vmem [#allocation2], %s337
        %p339 = pneg %p47
        %p340 = pneg %p44
        %p341 = pneg %p68
        %p342 = pneg %p65
        %p343 = pneg %p89
        %p344 = pneg %p86
        %p345 = pneg %p110
        %p346 = pneg %p107
        %p347 = pneg %p131
        %p348 = pneg %p128
        %p349 = pneg %p152
        %p350 = pneg %p149
        %p351 = pneg %p173
        %p352 = pneg %p170
        %p353 = pneg %p199
        %p354 = pneg %p196
        %s355 = sand.u32 %s186, 1
        %s356 = scalar_lea.sflag [#allocation4], %s355
        %s357 = sand.u32 %s186, 1
        %s358 = smul.addr %s357, 8
        %s359 = scalar_lea.vmem [#allocation11], %s358
        %v360 = vld [vmem:[%s308] sm:$0xff]
        %v361 = vld [vmem:[#allocation5] sm:$0xff]
        %v362 = vld [vmem:[#allocation5 + $0x8] sm:$0xff]
        %v363 = vld [vmem:[#allocation5 + $0x10] sm:$0xff]
        %v364 = vld [vmem:[#allocation5 + $0x18] sm:$0xff]
        %v365 = vld [vmem:[#allocation5 + $0x20] sm:$0xff]
        %v366 = vld [vmem:[#allocation5 + $0x28] sm:$0xff]
        %v367 = vld [vmem:[#allocation5 + $0x30] sm:$0xff]
        %v368 = vld [vmem:[#allocation5 + $0x38] sm:$0xff]
        %v369 = vld [vmem:[#allocation7] sm:$0x3]
        %v371 = vperm.slane %v369, 0
        %v372 = vperm.slane %v369, 1
        %vm375 = vcmask 261120
        %v377 = vsel %vm375, %v360, 0
        %379 = vmatpush.msra.mxu0 0.0
        %380 = vmatpush.msra.mxu0 0.0
        %381 = vmatpush.msra.mxu0 0.0
        %382 = vmatpush.msra.mxu0 0.0
        %383 = vmatpush.msra.mxu0 0.0
        %384 = vmatpush.msra.mxu0 0.0
        %385 = vmatpush.msra.mxu0 0.0
        %386 = vmatpush.msra.mxu0 0.0
        %387 = vmatpush.msra.mxu0 0.0
        %388 = vmatpush.msra.mxu0 0.0
        %389 = vmatpush.msra.mxu0 0.0
        %390 = vmatpush.msra.mxu0 0.0
        %391 = vmatpush.msra.mxu0 %v367
        %392 = vmatpush.msra.mxu0 %v365
        %393 = vmatpush.msra.mxu0 %v363
        %394 = vmatpush.msra.mxu0 %v361
        %395 = vmatmul.f32.gmra.mxu0 %v377
        %v396 = vpop.f32.mrf.mxu0
        %v397 = vadd.f32 %v371, %v396
        %398 = vdwg.mxu0
        %399 = vmatpush.msra.mxu0 0.0
        %400 = vmatpush.msra.mxu0 0.0
        %401 = vmatpush.msra.mxu0 0.0
        %402 = vmatpush.msra.mxu0 0.0
        %403 = vmatpush.msra.mxu0 0.0
        %404 = vmatpush.msra.mxu0 0.0
        %405 = vmatpush.msra.mxu0 0.0
        %406 = vmatpush.msra.mxu0 0.0
        %407 = vmatpush.msra.mxu0 0.0
        %408 = vmatpush.msra.mxu0 0.0
        %409 = vmatpush.msra.mxu0 0.0
        %410 = vmatpush.msra.mxu0 0.0
        %411 = vmatpush.msra.mxu0 %v368
        %412 = vmatpush.msra.mxu0 %v366
        %413 = vmatpush.msra.mxu0 %v364
        %414 = vmatpush.msra.mxu0 %v362
        %415 = vmatmul.f32.gmra.mxu0 %v377
        %v416 = vpop.f32.mrf.mxu0
        %v417 = vadd.f32 %v372, %v416
        %418 = vdwg.mxu0
        %v419 = vmax.f32 %v397, 0.0
        %v420 = vtanh.pop %v417
        %v421 = vadd.f32 %v419, %v420
        %v422 = vld [vmem:[#allocation8] sm:$0xff]
        %v423 = vld [vmem:[#allocation8 + $0x8] sm:$0xff]
        %v424 = vld [vmem:[#allocation8 + $0x10] sm:$0xff]
        %v425 = vld [vmem:[#allocation8 + $0x18] sm:$0xff]
        %v426 = vld [vmem:[#allocation8 + $0x20] sm:$0xff]
        %v427 = vld [vmem:[#allocation8 + $0x28] sm:$0xff]
        %v428 = vld [vmem:[#allocation8 + $0x30] sm:$0xff]
        %v429 = vld [vmem:[#allocation8 + $0x38] sm:$0xff]
        %v430 = vld [vmem:[#allocation8 + $0x40] sm:$0xff]
        %v431 = vld [vmem:[#allocation8 + $0x48] sm:$0xff]
        %v432 = vld [vmem:[#allocation8 + $0x50] sm:$0xff]
        %v433 = vld [vmem:[#allocation8 + $0x58] sm:$0xff]
        %v434 = vld [vmem:[#allocation8 + $0x60] sm:$0xff]
        %v435 = vld [vmem:[#allocation8 + $0x68] sm:$0xff]
        %v436 = vld [vmem:[#allocation8 + $0x70] sm:$0xff]
        %v437 = vld [vmem:[#allocation8 + $0x78] sm:$0xff]
        %v438 = vld [vmem:[%s4] sm:$0x1]
        %v440 = vperm.slane %v438, 0
        %442 = vmatpush.msra.mxu0 %v437
        %443 = vmatpush.msra.mxu0 %v436
        %444 = vmatpush.msra.mxu0 %v435
        %445 = vmatpush.msra.mxu0 %v434
        %446 = vmatpush.msra.mxu0 %v433
        %447 = vmatpush.msra.mxu0 %v432
        %448 = vmatpush.msra.mxu0 %v431
        %449 = vmatpush.msra.mxu0 %v430
        %450 = vmatpush.msra.mxu0 %v429
        %451 = vmatpush.msra.mxu0 %v428
        %452 = vmatpush.msra.mxu0 %v427
        %453 = vmatpush.msra.mxu0 %v426
        %454 = vmatpush.msra.mxu0 %v425
        %455 = vmatpush.msra.mxu0 %v424
        %456 = vmatpush.msra.mxu0 %v423
        %457 = vmatpush.msra.mxu0 %v422
        %458 = vmatmul.f32.gmra.mxu0 %v421
        %v459 = vpop.f32.mrf.mxu0
        %v460 = vadd.f32 %v440, %v459
        %461 = vdwg.mxu0
        %v462 = vmax.f32 %v460, 0.0
        %v463 = vld [vmem:[#allocation10] sm:$0xff]
        %v464 = vld [vmem:[#allocation10 + $0x8] sm:$0xff]
        %v465 = vld [vmem:[#allocation10 + $0x10] sm:$0xff]
        %v466 = vld [vmem:[#allocation10 + $0x18] sm:$0xff]
        %v467 = vld [vmem:[#allocation10 + $0x20] sm:$0xff]
        %v468 = vld [vmem:[#allocation10 + $0x28] sm:$0xff]
        %v469 = vld [vmem:[#allocation10 + $0x30] sm:$0xff]
        %v470 = vld [vmem:[#allocation10 + $0x38] sm:$0xff]
        %v471 = vld [vmem:[#allocation10 + $0x40] sm:$0xff]
        %v472 = vld [vmem:[#allocation10 + $0x48] sm:$0xff]
        %v473 = vld [vmem:[#allocation10 + $0x50] sm:$0xff]
        %v474 = vld [vmem:[#allocation10 + $0x58] sm:$0xff]
        %v475 = vld [vmem:[#allocation10 + $0x60] sm:$0xff]
        %v476 = vld [vmem:[#allocation10 + $0x68] sm:$0xff]
        %v477 = vld [vmem:[#allocation10 + $0x70] sm:$0xff]
        %v478 = vld [vmem:[#allocation10 + $0x78] sm:$0xff]
        %v479 = vld [vmem:[%s6] sm:$0x1]
        %v481 = vperm.slane %v479, 0
        %483 = vmatpush.msra.mxu0 %v478
        %484 = vmatpush.msra.mxu0 %v477
        %485 = vmatpush.msra.mxu0 %v476
        %486 = vmatpush.msra.mxu0 %v475
        %487 = vmatpush.msra.mxu0 %v474
        %488 = vmatpush.msra.mxu0 %v473
        %489 = vmatpush.msra.mxu0 %v472
        %490 = vmatpush.msra.mxu0 %v471
        %491 = vmatpush.msra.mxu0 %v470
        %492 = vmatpush.msra.mxu0 %v469
        %493 = vmatpush.msra.mxu0 %v468
        %494 = vmatpush.msra.mxu0 %v467
        %495 = vmatpush.msra.mxu0 %v466
        %496 = vmatpush.msra.mxu0 %v465
        %497 = vmatpush.msra.mxu0 %v464
        %498 = vmatpush.msra.mxu0 %v463
        %499 = vmatmul.f32.gmra.mxu0 %v462
        %v500 = vpop.f32.mrf.mxu0
        %v501 = vadd.f32 %v481, %v500
        %502 = vdwg.mxu0
        %503 = vst [vmem:[%s359] sm:$0xff] %v501
        %s504 = sand.u32 %s186, 1
        %s505 = scalar_lea.sflag [#allocation4], %s504
        %s506 = sand.u32 %s186, 1
        %s507 = smul.addr %s506, 8
        %s508 = scalar_lea.vmem [#allocation11], %s507
        // Predicated region
        $region69: #{tpu_custom_call.1} parent=47 // pred_check
          %p509 = pneg %p196
        $region70: #{tpu_custom_call.1} parent=47 // pred_check_branch
          %511 = sbr.rel (%p509) target = $region72
        $region71: #{tpu_custom_call.1} parent=47 // pred_region
          %513 = vsyncadd %s505, 0
          %s514 = smul.addr %s26, 8
          %s515 = scalar_lea.hbm %s7, %s514
          %s517 = sshll.u32 %s508, 4
          %s518 = int_to_ptr.vmem [resolvable:$true] %s517
          %s519 = sshll.u32 %s515, 4
          %s520 = int_to_ptr.hbm [resolvable:$true] %s519
          %522 = dma.vmem_to_hbm [thread:$0]  %s518, 128, %s520, %s505
        $region72: #{tpu_custom_call.1} parent=47 // pred_fallthru
          _
      $region48: #{tpu_custom_call.1} parent=5 // pred_fallthru
        _
      %p523 = scmp.le.s32.totalorder 2, %s21
      // Predicated region
      $region73: #{tpu_custom_call.1} parent=5 // pred_check
        %p524 = pneg %p523
      $region74: #{tpu_custom_call.1} parent=5 // pred_check_branch
        %526 = sbr.rel (%p524) target = $region76
      $region75: #{tpu_custom_call.1} parent=5 // pred_region
        %s527 = ssub.s32 %s21, 2
        // Predicated region
        $region77: #{tpu_custom_call.1} parent=75 // pred_check
          %p528 = pneg %p202
        $region78: #{tpu_custom_call.1} parent=75 // pred_check_branch
          %530 = sbr.rel (%p528) target = $region80
        $region79: #{tpu_custom_call.1} parent=75 // pred_region
          %s531 = sand.u32 %s187, 1
          %s532 = scalar_lea.sflag [#allocation4], %s531
          %s533 = sand.u32 %s187, 1
          %s534 = smul.addr %s533, 8
          %s535 = scalar_lea.vmem [#allocation11], %s534
          %537 = dma.done %s532, 128
        $region80: #{tpu_custom_call.1} parent=75 // pred_fallthru
          _
      $region76: #{tpu_custom_call.1} parent=5 // pred_fallthru
        _
    $region6: #{tpu_custom_call.1} parent=1 // loop_footer
      %s25 = sadd.s32 1, %s21
    $region7: #{tpu_custom_call.1} parent=1 // loop_footer_branch
      %20 = sbr.rel target = $region3
    $region8: #{tpu_custom_call.1} parent=1 // loop_exit
      _
    %538 = vsyncpa [#allocation3], 1
    %s539 = scalar_lea.sflag [#allocation3], 1
    %540 = vsyncpa %s539, 1
    %541 = vsyncpa [#allocation6], 1
    %542 = vsyncpa [#allocation9], 1
    %543 = vsyncpa [#allocation4], 1
    %s544 = scalar_lea.sflag [#allocation4], 1
    %545 = vsyncpa %s544, 1

</llo_original>
